<compile_context>
chip_gen: v5e
topology: v5e:2x2
jax: 0.10.0
libtpu: 0.0.40
codegen_flags: <defaults>
</compile_context>

<pallas_src>
import functools

import jax
import jax.numpy as jnp
from jax.experimental import pallas as pl
from jax.experimental.pallas import tpu as pltpu

IN_DIM = 28 * 28      # 784 (divisible by 8 -> valid sublane extent; last-dim
                      # blocks use the full 784 so the 128-lane rule is met)
HID_DIM = 128
ENC_DIM = 32          # bottleneck (fused away inside the kernel)


def _round_up(x, m):
    return (x + m - 1) // m * m


def autoencoder_kernel(x_ref, w1_ref, b1_ref, w23_ref, b23_ref,
                       w4_ref, b4_ref, out_ref):
    """One batch-tile of the full autoencoder forward pass.

    Matmul operands are bf16 (MXU-native), accumulation is f32 via
    preferred_element_type, and all elementwise math is f32.
    """
    x = x_ref[...].astype(jnp.bfloat16)                         # (tb, 784)

    # ---- encoder: Linear(784->128) + ReLU ----
    h1 = jnp.dot(x, w1_ref[...],
                 preferred_element_type=jnp.float32)            # (tb, 128)
    h1 = jnp.maximum(h1 + b1_ref[...], 0.0)

    # ---- fused Linear(128->32) @ Linear(32->128) + ReLU ----
    # No nonlinearity between the two middle Linears, so W23 = W2 @ W3 and
    # b23 = b2 @ W3 + b3 were precomputed in prepare_params (exact algebra).
    h2 = jnp.dot(h1.astype(jnp.bfloat16), w23_ref[...],
                 preferred_element_type=jnp.float32)            # (tb, 128)
    h2 = jnp.maximum(h2 + b23_ref[...], 0.0)

    # ---- decoder tail: Linear(128->784) + Sigmoid ----
    logits = jnp.dot(h2.astype(jnp.bfloat16), w4_ref[...],
                     preferred_element_type=jnp.float32)        # (tb, 784)
    logits = logits + b4_ref[...]

    # sigmoid(x) == 0.5 * tanh(0.5 * x) + 0.5  -> single EUP push per element
    out = 0.5 * jnp.tanh(0.5 * logits) + 0.5
    out_ref[...] = out.astype(out_ref.dtype)


def prepare_params(params):
    """Fuse the activation-free middle Linears and cast matmul weights to bf16.

    Weights are stored (in_dim, out_dim), i.e. already transposed relative to
    torch's (out, in), so the kernel computes x @ W + b.
    """
    w1, b1, w2, b2, w3, b3, w4, b4 = params
    f32, bf16 = jnp.float32, jnp.bfloat16

    w23 = (w2.astype(f32) @ w3.astype(f32))                 # (128, 128)
    b23 = b2.astype(f32) @ w3.astype(f32) + b3.astype(f32)  # (1, 128)

    return (w1.astype(bf16), b1.astype(f32),
            w23.astype(bf16), b23.astype(f32),
            w4.astype(bf16), b4.astype(f32))


@functools.partial(jax.jit, static_argnames=("tile_b", "out_dtype"))
def autoencoder_forward(x_img, fused_params, tile_b=512, out_dtype=None):
    """x_img: (B, 1, 28, 28) -> (B, 1, 28, 28).

    Accepts f32 or bf16 input; `out_dtype` defaults to the input dtype so the
    f32 (torch-matching) path never pays an extra cast pass, and a bf16
    pipeline gets halved HBM I/O for free.
    """
    w1, b1, w23, b23, w4, b4 = fused_params
    B = x_img.shape[0]
    x = x_img.reshape(B, IN_DIM)          # same as torch .view(-1, 784); free
    odt = jnp.dtype(out_dtype) if out_dtype is not None else x.dtype

    # Batch tile: large for throughput, but
    #  * never bigger than ~half the batch (rounded to 16) so big batches get
    #    >= 2 grid steps -> both v7x TensorCores + DMA/compute overlap,
    #  * multiple of 16 so bf16 inputs/outputs stay sublane-aligned.
    half = -(-B // 2)
    tile_eff = min(int(tile_b), max(16, _round_up(half, 16)))
    tile_eff = _round_up(tile_eff, 16)
    n_steps = -(-B // tile_eff)           # cdiv; ragged last tile is masked

    bcast = lambda i: (0, 0)              # weights/biases: one block, all steps

    # Only raise the scoped VMEM limit when this tile actually needs it
    # (double-buffered in/out tiles + double-buffered bf16 weights), and cap
    # generation-aware (75% of physical VMEM -> safe on v7x's 64 MiB).
    in_item = jnp.dtype(x.dtype).itemsize
    out_item = jnp.dtype(odt).itemsize
    io_bytes = 2 * tile_eff * IN_DIM * (in_item + out_item)
    w_bytes = 2 * 2 * (IN_DIM * HID_DIM + HID_DIM * HID_DIM + HID_DIM * IN_DIM)
    vmem_need = io_bytes + w_bytes + (1 << 20)  # + headroom for Mosaic scratch
    if vmem_need <= (12 << 20):
        vmem_limit = None
    else:
        try:
            cap = int(pltpu.get_tpu_info().vmem_capacity_bytes)
        except Exception:
            cap = 64 << 20
        vmem_limit = min(2 * vmem_need, cap * 3 // 4)

    out = pl.pallas_call(
        autoencoder_kernel,
        out_shape=jax.ShapeDtypeStruct((B, IN_DIM), odt),
        grid_spec=pl.GridSpec(
            grid=(n_steps,),
            in_specs=[
                pl.BlockSpec((tile_eff, IN_DIM), lambda i: (i, 0)),  # x
                pl.BlockSpec((IN_DIM, HID_DIM), bcast),              # W1 bf16
                pl.BlockSpec((1, HID_DIM), bcast),                   # b1
                pl.BlockSpec((HID_DIM, HID_DIM), bcast),             # W23 bf16
                pl.BlockSpec((1, HID_DIM), bcast),                   # b23
                pl.BlockSpec((HID_DIM, IN_DIM), bcast),              # W4 bf16
                pl.BlockSpec((1, IN_DIM), bcast),                    # b4
            ],
            out_specs=pl.BlockSpec((tile_eff, IN_DIM), lambda i: (i, 0)),
        ),
        compiler_params=pltpu.CompilerParams(
            dimension_semantics=("parallel",),
            vmem_limit_bytes=vmem_limit),
    )(x, w1, b1, w23, b23, w4, b4)

    return out.reshape(B, 1, 28, 28)      # reshape only; no slice pass


def init_params(key):
    """Deterministic init matching torch.nn.Linear (U(-1/sqrt(fan_in), ...))."""
    def linear(k, fan_in, fan_out):
        kw, kb = jax.random.split(k)
        bound = 1.0 / jnp.sqrt(fan_in)
        w = jax.random.uniform(kw, (fan_in, fan_out), jnp.float32, -bound, bound)
        b = jax.random.uniform(kb, (1, fan_out), jnp.float32, -bound, bound)
        return w, b

    k1, k2, k3, k4 = jax.random.split(key, 4)
    w1, b1 = linear(k1, IN_DIM, HID_DIM)
    w2, b2 = linear(k2, HID_DIM, ENC_DIM)
    w3, b3 = linear(k3, ENC_DIM, HID_DIM)
    w4, b4 = linear(k4, HID_DIM, IN_DIM)
    return (w1, b1, w2, b2, w3, b3, w4, b4)


def reference_forward(x_img, params):
    """Pure-JAX f32 reference (unfused) with identical semantics."""
    w1, b1, w2, b2, w3, b3, w4, b4 = params
    x = x_img.astype(jnp.float32).reshape(x_img.shape[0], IN_DIM)
    h1 = jnp.maximum(x @ w1 + b1, 0.0)
    z = h1 @ w2 + b2
    h2 = jnp.maximum(z @ w3 + b3, 0.0)
    y = jax.nn.sigmoid(h2 @ w4 + b4)
    return y.reshape(-1, 1, 28, 28)


if __name__ == "__main__":
    key = jax.random.PRNGKey(0)
    k_params, k_x1, k_x2 = jax.random.split(key, 3)

    params = init_params(k_params)
    fused_params = prepare_params(params)

    # Demo 1: small batch; single ragged tile (B=8 < tile 16, masked store).
    x1 = jax.random.uniform(k_x1, (8, 1, 28, 28), jnp.float32)
    out1 = jax.block_until_ready(autoencoder_forward(x1, fused_params))
    ref1 = reference_forward(x1, params)
    assert out1.shape == (8, 1, 28, 28) and out1.dtype == jnp.float32
    # bf16 matmul operands + fused middle Linears -> loosened tolerance
    # vs f32 reference (outputs are sigmoid-bounded in [0, 1]).
    assert jnp.allclose(out1, ref1, atol=2e-2, rtol=2e-2), "mismatch (B=8)"

    # Demo 2: batch not a multiple of the tile -> 2 grid steps, ragged last
    # block (exercises the cdiv grid + boundary masking, no wrapper padding).
    x2 = jax.random.uniform(k_x2, (20, 1, 28, 28), jnp.float32)
    out2 = jax.block_until_ready(autoencoder_forward(x2, fused_params))
    ref2 = reference_forward(x2, params)
    assert out2.shape == (20, 1, 28, 28)
    assert jnp.allclose(out2, ref2, atol=2e-2, rtol=2e-2), "mismatch (B=20)"

    print("KERNEL_OK")
</pallas_src>

<mosaic_0001>
module attributes {stable_mosaic.version = 11 : i64} {
  func.func @autoencoder_kernel(%arg0: i32, %arg1: memref<16x784xf32, #tpu.memory_space<vmem>>, %arg2: memref<784x128xbf16, #tpu.memory_space<vmem>>, %arg3: memref<1x128xf32, #tpu.memory_space<vmem>>, %arg4: memref<128x128xbf16, #tpu.memory_space<vmem>>, %arg5: memref<1x128xf32, #tpu.memory_space<vmem>>, %arg6: memref<128x784xbf16, #tpu.memory_space<vmem>>, %arg7: memref<1x784xf32, #tpu.memory_space<vmem>>, %arg8: memref<16x784xf32, #tpu.memory_space<vmem>>) attributes {dimension_semantics = [#tpu.dimension_semantics<parallel>], iteration_bounds = array<i64: 1>, scalar_prefetch = 0 : i64, scratch_operands = 0 : i64, tpu.core_type = #tpu.core_type<tc>, window_params = [{transform_indices = @transform_0, window_bounds = array<i64: 16, 784>}, {pipeline_mode = #tpu.pipeline_mode<synchronous>, transform_indices = @transform_1, window_bounds = array<i64: 784, 128>}, {pipeline_mode = #tpu.pipeline_mode<synchronous>, transform_indices = @transform_2, window_bounds = array<i64: 1, 128>}, {pipeline_mode = #tpu.pipeline_mode<synchronous>, transform_indices = @transform_3, window_bounds = array<i64: 128, 128>}, {pipeline_mode = #tpu.pipeline_mode<synchronous>, transform_indices = @transform_4, window_bounds = array<i64: 1, 128>}, {pipeline_mode = #tpu.pipeline_mode<synchronous>, transform_indices = @transform_5, window_bounds = array<i64: 128, 784>}, {pipeline_mode = #tpu.pipeline_mode<synchronous>, transform_indices = @transform_6, window_bounds = array<i64: 1, 784>}, {transform_indices = @transform_7, window_bounds = array<i64: 16, 784>}]} {
    %c0 = arith.constant 0 : index
    %c0_0 = arith.constant 0 : index
    %0 = vector.load %arg1[%c0, %c0_0] : memref<16x784xf32, #tpu.memory_space<vmem>>, vector<16x784xf32>
    %1 = arith.truncf %0 : vector<16x784xf32> to vector<16x784xbf16>
    %c0_1 = arith.constant 0 : index
    %c0_2 = arith.constant 0 : index
    %2 = vector.load %arg2[%c0_1, %c0_2] : memref<784x128xbf16, #tpu.memory_space<vmem>>, vector<784x128xbf16>
    %cst = arith.constant dense<0.000000e+00> : vector<16x128xf32>
    %3 = tpu.matmul %1, %2, %cst {dimension_numbers = #tpu.dot_dimension_numbers<[1], [0], [0], [1], [0, 0, 1, 1], [], []>} : vector<16x784xbf16>, vector<784x128xbf16>, vector<16x128xf32> -> vector<16x128xf32>
    %c0_3 = arith.constant 0 : index
    %c0_4 = arith.constant 0 : index
    %4 = vector.load %arg3[%c0_3, %c0_4] : memref<1x128xf32, #tpu.memory_space<vmem>>, vector<1x128xf32>
    %5 = vector.broadcast %4 : vector<1x128xf32> to vector<16x128xf32>
    %6 = arith.addf %3, %5 : vector<16x128xf32>
    %cst_5 = arith.constant 0.000000e+00 : f32
    %7 = vector.broadcast %cst_5 : f32 to vector<16x128xf32>
    %8 = arith.maximumf %6, %7 : vector<16x128xf32>
    %9 = arith.truncf %8 : vector<16x128xf32> to vector<16x128xbf16>
    %c0_6 = arith.constant 0 : index
    %c0_7 = arith.constant 0 : index
    %10 = vector.load %arg4[%c0_6, %c0_7] : memref<128x128xbf16, #tpu.memory_space<vmem>>, vector<128x128xbf16>
    %cst_8 = arith.constant dense<0.000000e+00> : vector<16x128xf32>
    %11 = tpu.matmul %9, %10, %cst_8 {dimension_numbers = #tpu.dot_dimension_numbers<[1], [0], [0], [1], [0, 0, 1, 1], [], []>} : vector<16x128xbf16>, vector<128x128xbf16>, vector<16x128xf32> -> vector<16x128xf32>
    %c0_9 = arith.constant 0 : index
    %c0_10 = arith.constant 0 : index
    %12 = vector.load %arg5[%c0_9, %c0_10] : memref<1x128xf32, #tpu.memory_space<vmem>>, vector<1x128xf32>
    %13 = vector.broadcast %12 : vector<1x128xf32> to vector<16x128xf32>
    %14 = arith.addf %11, %13 : vector<16x128xf32>
    %cst_11 = arith.constant 0.000000e+00 : f32
    %15 = vector.broadcast %cst_11 : f32 to vector<16x128xf32>
    %16 = arith.maximumf %14, %15 : vector<16x128xf32>
    %17 = arith.truncf %16 : vector<16x128xf32> to vector<16x128xbf16>
    %c0_12 = arith.constant 0 : index
    %c0_13 = arith.constant 0 : index
    %18 = vector.load %arg6[%c0_12, %c0_13] : memref<128x784xbf16, #tpu.memory_space<vmem>>, vector<128x784xbf16>
    %cst_14 = arith.constant dense<0.000000e+00> : vector<16x784xf32>
    %19 = tpu.matmul %17, %18, %cst_14 {dimension_numbers = #tpu.dot_dimension_numbers<[1], [0], [0], [1], [0, 0, 1, 1], [], []>} : vector<16x128xbf16>, vector<128x784xbf16>, vector<16x784xf32> -> vector<16x784xf32>
    %c0_15 = arith.constant 0 : index
    %c0_16 = arith.constant 0 : index
    %20 = vector.load %arg7[%c0_15, %c0_16] : memref<1x784xf32, #tpu.memory_space<vmem>>, vector<1x784xf32>
    %21 = vector.broadcast %20 : vector<1x784xf32> to vector<16x784xf32>
    %22 = arith.addf %19, %21 : vector<16x784xf32>
    %cst_17 = arith.constant 5.000000e-01 : f32
    %23 = vector.broadcast %cst_17 : f32 to vector<16x784xf32>
    %24 = arith.mulf %23, %22 : vector<16x784xf32>
    %25 = math.tanh %24 : vector<16x784xf32>
    %cst_18 = arith.constant 5.000000e-01 : f32
    %26 = vector.broadcast %cst_18 : f32 to vector<16x784xf32>
    %27 = arith.mulf %26, %25 : vector<16x784xf32>
    %cst_19 = arith.constant 5.000000e-01 : f32
    %28 = vector.broadcast %cst_19 : f32 to vector<16x784xf32>
    %29 = arith.addf %27, %28 : vector<16x784xf32>
    %c0_20 = arith.constant 0 : index
    %c0_21 = arith.constant 0 : index
    %30 = vector.load %arg8[%c0_20, %c0_21] : memref<16x784xf32, #tpu.memory_space<vmem>>, vector<16x784xf32>
    tpu.vector_store %arg8[%c0_20, %c0_21], %29 {strides = array<i32>} : memref<16x784xf32, #tpu.memory_space<vmem>>, vector<16x784xf32>,
    return
  }
  func.func @transform_0(%arg0: i32) -> (i32, i32) {
    %c0_i32 = arith.constant 0 : i32
    %c0_i32_0 = arith.constant 0 : i32
    return %arg0, %c0_i32 : i32, i32
  }
  func.func @transform_1(%arg0: i32) -> (i32, i32) {
    %c0_i32 = arith.constant 0 : i32
    %c0_i32_0 = arith.constant 0 : i32
    %c0_i32_1 = arith.constant 0 : i32
    return %c0_i32, %c0_i32_0 : i32, i32
  }
  func.func @transform_2(%arg0: i32) -> (i32, i32) {
    %c0_i32 = arith.constant 0 : i32
    %c0_i32_0 = arith.constant 0 : i32
    %c0_i32_1 = arith.constant 0 : i32
    return %c0_i32, %c0_i32_0 : i32, i32
  }
  func.func @transform_3(%arg0: i32) -> (i32, i32) {
    %c0_i32 = arith.constant 0 : i32
    %c0_i32_0 = arith.constant 0 : i32
    %c0_i32_1 = arith.constant 0 : i32
    return %c0_i32, %c0_i32_0 : i32, i32
  }
  func.func @transform_4(%arg0: i32) -> (i32, i32) {
    %c0_i32 = arith.constant 0 : i32
    %c0_i32_0 = arith.constant 0 : i32
    %c0_i32_1 = arith.constant 0 : i32
    return %c0_i32, %c0_i32_0 : i32, i32
  }
  func.func @transform_5(%arg0: i32) -> (i32, i32) {
    %c0_i32 = arith.constant 0 : i32
    %c0_i32_0 = arith.constant 0 : i32
    %c0_i32_1 = arith.constant 0 : i32
    return %c0_i32, %c0_i32_0 : i32, i32
  }
  func.func @transform_6(%arg0: i32) -> (i32, i32) {
    %c0_i32 = arith.constant 0 : i32
    %c0_i32_0 = arith.constant 0 : i32
    %c0_i32_1 = arith.constant 0 : i32
    return %c0_i32, %c0_i32_0 : i32, i32
  }
  func.func @transform_7(%arg0: i32) -> (i32, i32) {
    %c0_i32 = arith.constant 0 : i32
    %c0_i32_0 = arith.constant 0 : i32
    return %arg0, %c0_i32 : i32, i32
  }
}

</mosaic_0001>

<llo_original>
// kernel: autoencoder_forward.1
$region0: #{autoencoder_forward.1}
  #allocation0 [shape = 'u32[]', space=smem, size = 0x4, offset = 0x4, fixed_abs, tag = 'smem constant byte address 0x4 - core index']
  #allocation1 [shape = 'u32[72,128]{1,0:T(1,128)}', space=vmem, size = 0x9000, scoped, tag = 'internal scratch']
  %s0 = inlined_call_operand.vmem [shape: f32[8,784], index: 0, kind: input, shape index: {}]
  %s1 = inlined_call_operand.vmem [shape: bf16[784,128], index: 1, kind: input, shape index: {}]
  %s2 = inlined_call_operand.vmem [shape: f32[1,128], index: 2, kind: input, shape index: {}]
  %s3 = inlined_call_operand.vmem [shape: bf16[128,128], index: 3, kind: input, shape index: {}]
  %s4 = inlined_call_operand.vmem [shape: f32[1,128], index: 4, kind: input, shape index: {}]
  %s5 = inlined_call_operand.vmem [shape: bf16[128,784], index: 5, kind: input, shape index: {}]
  %s6 = inlined_call_operand.vmem [shape: f32[1,784], index: 6, kind: input, shape index: {}]
  %s7 = inlined_call_operand.vmem [shape: f32[8,784], index: 7, kind: output, shape index: {}]
  %s8 = sld [smem:[#allocation0]]
  $region57: #{autoencoder_forward.1} parent=0
    _
  %s10 = ssub.s32 1, %s8
  %s11 = scalar_select 0, %s10, %s8
  $region1: #{autoencoder_forward.1} parent=0
    #allocation2 [shape = 'u8[57344]{0}', space=vmem, size = 0xe000, scoped, tag = 'output window, operand 0, single buffered']
    // Predicated region
    $region2: #{autoencoder_forward.1} parent=1 // pred_check
      _
    $region3: #{autoencoder_forward.1} parent=1 // pred_check_branch
      %13 = sbr.rel (0) target = $region5
    $region4: #{autoencoder_forward.1} parent=1 // pred_region
      _
    $region5: #{autoencoder_forward.1} parent=1 // pred_fallthru
      _
    // Predicated region
    $region6: #{autoencoder_forward.1} parent=1 // pred_check
      _
    $region7: #{autoencoder_forward.1} parent=1 // pred_check_branch
      %15 = sbr.rel (0) target = $region9
    $region8: #{autoencoder_forward.1} parent=1 // pred_region
      _
    $region9: #{autoencoder_forward.1} parent=1 // pred_fallthru
      _
    // Predicated region
    $region10: #{autoencoder_forward.1} parent=1 // pred_check
      _
    $region11: #{autoencoder_forward.1} parent=1 // pred_check_branch
      %17 = sbr.rel (0) target = $region13
    $region12: #{autoencoder_forward.1} parent=1 // pred_region
      _
    $region13: #{autoencoder_forward.1} parent=1 // pred_fallthru
      _
    // Predicated region
    $region14: #{autoencoder_forward.1} parent=1 // pred_check
      _
    $region15: #{autoencoder_forward.1} parent=1 // pred_check_branch
      %19 = sbr.rel (0) target = $region17
    $region16: #{autoencoder_forward.1} parent=1 // pred_region
      _
    $region17: #{autoencoder_forward.1} parent=1 // pred_fallthru
      _
    // Predicated region
    $region18: #{autoencoder_forward.1} parent=1 // pred_check
      _
    $region19: #{autoencoder_forward.1} parent=1 // pred_check_branch
      %21 = sbr.rel (0) target = $region21
    $region20: #{autoencoder_forward.1} parent=1 // pred_region
      _
    $region21: #{autoencoder_forward.1} parent=1 // pred_fallthru
      _
    // Predicated region
    $region22: #{autoencoder_forward.1} parent=1 // pred_check
      _
    $region23: #{autoencoder_forward.1} parent=1 // pred_check_branch
      %23 = sbr.rel (0) target = $region25
    $region24: #{autoencoder_forward.1} parent=1 // pred_region
      _
    $region25: #{autoencoder_forward.1} parent=1 // pred_fallthru
      _
    // Predicated region
    $region26: #{autoencoder_forward.1} parent=1 // pred_check
      _
    $region27: #{autoencoder_forward.1} parent=1 // pred_check_branch
      %25 = sbr.rel (0) target = $region29
    $region28: #{autoencoder_forward.1} parent=1 // pred_region
      _
    $region29: #{autoencoder_forward.1} parent=1 // pred_fallthru
      _
    %v27 = vld [vmem:[%s0] sm:$0xff]
    %v28 = vld [vmem:[%s0 + $0x8] sm:$0xff]
    %v29 = vld [vmem:[%s0 + $0x10] sm:$0xff]
    %v30 = vld [vmem:[%s0 + $0x18] sm:$0xff]
    %v31 = vld [vmem:[%s0 + $0x20] sm:$0xff]
    %v32 = vld [vmem:[%s0 + $0x28] sm:$0xff]
    %v33 = vld [vmem:[%s0 + $0x30] sm:$0xff]
    %v34 = vld [vmem:[%s0 + $0x38] sm:$0xff]
    %v35 = vld [vmem:[%s0 + $0x40] sm:$0xff]
    %v36 = vld [vmem:[%s0 + $0x48] sm:$0xff]
    %v37 = vld [vmem:[%s0 + $0x50] sm:$0xff]
    %v38 = vld [vmem:[%s0 + $0x58] sm:$0xff]
    %v39 = vld [vmem:[%s0 + $0x60] sm:$0xff]
    %v40 = vld [vmem:[%s0 + $0x68] sm:$0xff]
    %v41 = vpack.c.bf16 %v34, %v27
    %v42 = vpack.c.bf16 %v35, %v28
    %v43 = vpack.c.bf16 %v36, %v29
    %v44 = vpack.c.bf16 %v37, %v30
    %v45 = vpack.c.bf16 %v38, %v31
    %v46 = vpack.c.bf16 %v39, %v32
    %v47 = vpack.c.bf16 %v40, %v33
    %v48 = vld [vmem:[%s1] sm:$0xf]
    %v49 = vld [vmem:[%s1 + $0x4] sm:$0xf]
    %v50 = vld [vmem:[%s1 + $0x8] sm:$0xf]
    %v51 = vld [vmem:[%s1 + $0xc] sm:$0xf]
    %v52 = vld [vmem:[%s1 + $0x10] sm:$0xf]
    %v53 = vld [vmem:[%s1 + $0x14] sm:$0xf]
    %v54 = vld [vmem:[%s1 + $0x18] sm:$0xf]
    %v55 = vld [vmem:[%s1 + $0x1c] sm:$0xf]
    %v56 = vld [vmem:[%s1 + $0x20] sm:$0xf]
    %v57 = vld [vmem:[%s1 + $0x24] sm:$0xf]
    %v58 = vld [vmem:[%s1 + $0x28] sm:$0xf]
    %v59 = vld [vmem:[%s1 + $0x2c] sm:$0xf]
    %v60 = vld [vmem:[%s1 + $0x30] sm:$0xf]
    %v61 = vld [vmem:[%s1 + $0x34] sm:$0xf]
    %v62 = vld [vmem:[%s1 + $0x38] sm:$0xf]
    %v63 = vld [vmem:[%s1 + $0x3c] sm:$0xf]
    %v64 = vld [vmem:[%s1 + $0x40] sm:$0xf]
    %v65 = vld [vmem:[%s1 + $0x44] sm:$0xf]
    %v66 = vld [vmem:[%s1 + $0x48] sm:$0xf]
    %v67 = vld [vmem:[%s1 + $0x4c] sm:$0xf]
    %v68 = vld [vmem:[%s1 + $0x50] sm:$0xf]
    %v69 = vld [vmem:[%s1 + $0x54] sm:$0xf]
    %v70 = vld [vmem:[%s1 + $0x58] sm:$0xf]
    %v71 = vld [vmem:[%s1 + $0x5c] sm:$0xf]
    %v72 = vld [vmem:[%s1 + $0x60] sm:$0xf]
    %v73 = vld [vmem:[%s1 + $0x64] sm:$0xf]
    %v74 = vld [vmem:[%s1 + $0x68] sm:$0xf]
    %v75 = vld [vmem:[%s1 + $0x6c] sm:$0xf]
    %v76 = vld [vmem:[%s1 + $0x70] sm:$0xf]
    %v77 = vld [vmem:[%s1 + $0x74] sm:$0xf]
    %v78 = vld [vmem:[%s1 + $0x78] sm:$0xf]
    %v79 = vld [vmem:[%s1 + $0x7c] sm:$0xf]
    %v80 = vld [vmem:[%s1 + $0x80] sm:$0xf]
    %v81 = vld [vmem:[%s1 + $0x84] sm:$0xf]
    %v82 = vld [vmem:[%s1 + $0x88] sm:$0xf]
    %v83 = vld [vmem:[%s1 + $0x8c] sm:$0xf]
    %v84 = vld [vmem:[%s1 + $0x90] sm:$0xf]
    %v85 = vld [vmem:[%s1 + $0x94] sm:$0xf]
    %v86 = vld [vmem:[%s1 + $0x98] sm:$0xf]
    %v87 = vld [vmem:[%s1 + $0x9c] sm:$0xf]
    %v88 = vld [vmem:[%s1 + $0xa0] sm:$0xf]
    %v89 = vld [vmem:[%s1 + $0xa4] sm:$0xf]
    %v90 = vld [vmem:[%s1 + $0xa8] sm:$0xf]
    %v91 = vld [vmem:[%s1 + $0xac] sm:$0xf]
    %v92 = vld [vmem:[%s1 + $0xb0] sm:$0xf]
    %v93 = vld [vmem:[%s1 + $0xb4] sm:$0xf]
    %v94 = vld [vmem:[%s1 + $0xb8] sm:$0xf]
    %v95 = vld [vmem:[%s1 + $0xbc] sm:$0xf]
    %v96 = vld [vmem:[%s1 + $0xc0] sm:$0xf]
    %v97 = vld [vmem:[%s1 + $0xc4] sm:$0xf]
    %v98 = vld [vmem:[%s1 + $0xc8] sm:$0xf]
    %v99 = vld [vmem:[%s1 + $0xcc] sm:$0xf]
    %v100 = vld [vmem:[%s1 + $0xd0] sm:$0xf]
    %v101 = vld [vmem:[%s1 + $0xd4] sm:$0xf]
    %v102 = vld [vmem:[%s1 + $0xd8] sm:$0xf]
    %v103 = vld [vmem:[%s1 + $0xdc] sm:$0xf]
    %v104 = vld [vmem:[%s1 + $0xe0] sm:$0xf]
    %v105 = vld [vmem:[%s1 + $0xe4] sm:$0xf]
    %v106 = vld [vmem:[%s1 + $0xe8] sm:$0xf]
    %v107 = vld [vmem:[%s1 + $0xec] sm:$0xf]
    %v108 = vld [vmem:[%s1 + $0xf0] sm:$0xf]
    %v109 = vld [vmem:[%s1 + $0xf4] sm:$0xf]
    %v110 = vld [vmem:[%s1 + $0xf8] sm:$0xf]
    %v111 = vld [vmem:[%s1 + $0xfc] sm:$0xf]
    %v112 = vld [vmem:[%s1 + $0x100] sm:$0xf]
    %v113 = vld [vmem:[%s1 + $0x104] sm:$0xf]
    %v114 = vld [vmem:[%s1 + $0x108] sm:$0xf]
    %v115 = vld [vmem:[%s1 + $0x10c] sm:$0xf]
    %v116 = vld [vmem:[%s1 + $0x110] sm:$0xf]
    %v117 = vld [vmem:[%s1 + $0x114] sm:$0xf]
    %v118 = vld [vmem:[%s1 + $0x118] sm:$0xf]
    %v119 = vld [vmem:[%s1 + $0x11c] sm:$0xf]
    %v120 = vld [vmem:[%s1 + $0x120] sm:$0xf]
    %v121 = vld [vmem:[%s1 + $0x124] sm:$0xf]
    %v122 = vld [vmem:[%s1 + $0x128] sm:$0xf]
    %v123 = vld [vmem:[%s1 + $0x12c] sm:$0xf]
    %v124 = vld [vmem:[%s1 + $0x130] sm:$0xf]
    %v125 = vld [vmem:[%s1 + $0x134] sm:$0xf]
    %v126 = vld [vmem:[%s1 + $0x138] sm:$0xf]
    %v127 = vld [vmem:[%s1 + $0x13c] sm:$0xf]
    %v128 = vld [vmem:[%s1 + $0x140] sm:$0xf]
    %v129 = vld [vmem:[%s1 + $0x144] sm:$0xf]
    %v130 = vld [vmem:[%s1 + $0x148] sm:$0xf]
    %v131 = vld [vmem:[%s1 + $0x14c] sm:$0xf]
    %v132 = vld [vmem:[%s1 + $0x150] sm:$0xf]
    %v133 = vld [vmem:[%s1 + $0x154] sm:$0xf]
    %v134 = vld [vmem:[%s1 + $0x158] sm:$0xf]
    %v135 = vld [vmem:[%s1 + $0x15c] sm:$0xf]
    %v136 = vld [vmem:[%s1 + $0x160] sm:$0xf]
    %v137 = vld [vmem:[%s1 + $0x164] sm:$0xf]
    %v138 = vld [vmem:[%s1 + $0x168] sm:$0xf]
    %v139 = vld [vmem:[%s1 + $0x16c] sm:$0xf]
    %v140 = vld [vmem:[%s1 + $0x170] sm:$0xf]
    %v141 = vld [vmem:[%s1 + $0x174] sm:$0xf]
    %v142 = vld [vmem:[%s1 + $0x178] sm:$0xf]
    %v143 = vld [vmem:[%s1 + $0x17c] sm:$0xf]
    %v144 = vld [vmem:[%s1 + $0x180] sm:$0xf]
    %v145 = vld [vmem:[%s1 + $0x184] sm:$0xf]
    %v146 = vld [vmem:[%s2] sm:$0x1]
    %v148 = vperm.slane %v146, 0
    %v248 = vunpack.c.l.b16 %v48
    %v249 = vunpack.c.l.b16 %v49
    %v250 = vunpack.c.l.b16 %v50
    %v251 = vunpack.c.l.b16 %v51
    %v252 = vunpack.c.l.b16 %v52
    %v253 = vunpack.c.l.b16 %v53
    %v254 = vunpack.c.l.b16 %v54
    %v255 = vunpack.c.l.b16 %v55
    %v256 = vunpack.c.l.b16 %v56
    %v257 = vunpack.c.l.b16 %v57
    %v258 = vunpack.c.l.b16 %v58
    %v259 = vunpack.c.l.b16 %v59
    %v260 = vunpack.c.l.b16 %v60
    %v261 = vunpack.c.l.b16 %v61
    %v262 = vunpack.c.l.b16 %v62
    %v263 = vunpack.c.l.b16 %v63
    %v264 = vunpack.c.l.b16 %v64
    %v265 = vunpack.c.l.b16 %v65
    %v266 = vunpack.c.l.b16 %v66
    %v267 = vunpack.c.l.b16 %v67
    %v268 = vunpack.c.l.b16 %v68
    %v269 = vunpack.c.l.b16 %v69
    %v270 = vunpack.c.l.b16 %v70
    %v271 = vunpack.c.l.b16 %v71
    %v272 = vunpack.c.l.b16 %v72
    %v273 = vunpack.c.l.b16 %v73
    %v274 = vunpack.c.l.b16 %v74
    %v275 = vunpack.c.l.b16 %v75
    %v276 = vunpack.c.l.b16 %v76
    %v277 = vunpack.c.l.b16 %v77
    %v278 = vunpack.c.l.b16 %v78
    %v279 = vunpack.c.l.b16 %v79
    %v280 = vunpack.c.l.b16 %v80
    %v281 = vunpack.c.l.b16 %v81
    %v282 = vunpack.c.l.b16 %v82
    %v283 = vunpack.c.l.b16 %v83
    %v284 = vunpack.c.l.b16 %v84
    %v285 = vunpack.c.l.b16 %v85
    %v286 = vunpack.c.l.b16 %v86
    %v287 = vunpack.c.l.b16 %v87
    %v288 = vunpack.c.l.b16 %v88
    %v289 = vunpack.c.l.b16 %v89
    %v290 = vunpack.c.l.b16 %v90
    %v291 = vunpack.c.l.b16 %v91
    %v292 = vunpack.c.l.b16 %v92
    %v293 = vunpack.c.l.b16 %v93
    %v294 = vunpack.c.l.b16 %v94
    %v295 = vunpack.c.l.b16 %v95
    %v296 = vunpack.c.l.b16 %v96
    %v297 = vunpack.c.l.b16 %v97
    %v298 = vunpack.c.l.b16 %v98
    %v299 = vunpack.c.l.b16 %v99
    %v300 = vunpack.c.l.b16 %v100
    %v301 = vunpack.c.l.b16 %v101
    %v302 = vunpack.c.l.b16 %v102
    %v303 = vunpack.c.l.b16 %v103
    %v304 = vunpack.c.l.b16 %v104
    %v305 = vunpack.c.l.b16 %v105
    %v306 = vunpack.c.l.b16 %v106
    %v307 = vunpack.c.l.b16 %v107
    %v308 = vunpack.c.l.b16 %v108
    %v309 = vunpack.c.l.b16 %v109
    %v310 = vunpack.c.l.b16 %v110
    %v311 = vunpack.c.l.b16 %v111
    %v312 = vunpack.c.l.b16 %v112
    %v313 = vunpack.c.l.b16 %v113
    %v314 = vunpack.c.l.b16 %v114
    %v315 = vunpack.c.l.b16 %v115
    %v316 = vunpack.c.l.b16 %v116
    %v317 = vunpack.c.l.b16 %v117
    %v318 = vunpack.c.l.b16 %v118
    %v319 = vunpack.c.l.b16 %v119
    %v320 = vunpack.c.l.b16 %v120
    %v321 = vunpack.c.l.b16 %v121
    %v322 = vunpack.c.l.b16 %v122
    %v323 = vunpack.c.l.b16 %v123
    %v324 = vunpack.c.l.b16 %v124
    %v325 = vunpack.c.l.b16 %v125
    %v326 = vunpack.c.l.b16 %v126
    %v327 = vunpack.c.l.b16 %v127
    %v328 = vunpack.c.l.b16 %v128
    %v329 = vunpack.c.l.b16 %v129
    %v330 = vunpack.c.l.b16 %v130
    %v331 = vunpack.c.l.b16 %v131
    %v332 = vunpack.c.l.b16 %v132
    %v333 = vunpack.c.l.b16 %v133
    %v334 = vunpack.c.l.b16 %v134
    %v335 = vunpack.c.l.b16 %v135
    %v336 = vunpack.c.l.b16 %v136
    %v337 = vunpack.c.l.b16 %v137
    %v338 = vunpack.c.l.b16 %v138
    %v339 = vunpack.c.l.b16 %v139
    %v340 = vunpack.c.l.b16 %v140
    %v341 = vunpack.c.l.b16 %v141
    %v342 = vunpack.c.l.b16 %v142
    %v343 = vunpack.c.l.b16 %v143
    %v344 = vunpack.c.l.b16 %v144
    %v345 = vunpack.c.l.b16 %v145
    %v346 = vpack.c.b16 %v249, %v248
    %v347 = vpack.c.b16 %v251, %v250
    %v348 = vpack.c.b16 %v253, %v252
    %v349 = vpack.c.b16 %v255, %v254
    %v350 = vpack.c.b16 %v257, %v256
    %v351 = vpack.c.b16 %v259, %v258
    %v352 = vpack.c.b16 %v261, %v260
    %v353 = vpack.c.b16 %v263, %v262
    %v354 = vpack.c.b16 %v265, %v264
    %v355 = vpack.c.b16 %v267, %v266
    %v356 = vpack.c.b16 %v269, %v268
    %v357 = vpack.c.b16 %v271, %v270
    %v358 = vpack.c.b16 %v273, %v272
    %v359 = vpack.c.b16 %v275, %v274
    %v360 = vpack.c.b16 %v277, %v276
    %v361 = vpack.c.b16 %v279, %v278
    %v362 = vpack.c.b16 %v281, %v280
    %v363 = vpack.c.b16 %v283, %v282
    %v364 = vpack.c.b16 %v285, %v284
    %v365 = vpack.c.b16 %v287, %v286
    %v366 = vpack.c.b16 %v289, %v288
    %v367 = vpack.c.b16 %v291, %v290
    %v368 = vpack.c.b16 %v293, %v292
    %v369 = vpack.c.b16 %v295, %v294
    %v370 = vpack.c.b16 %v297, %v296
    %v371 = vpack.c.b16 %v299, %v298
    %v372 = vpack.c.b16 %v301, %v300
    %v373 = vpack.c.b16 %v303, %v302
    %v374 = vpack.c.b16 %v305, %v304
    %v375 = vpack.c.b16 %v307, %v306
    %v376 = vpack.c.b16 %v309, %v308
    %v377 = vpack.c.b16 %v311, %v310
    %v378 = vpack.c.b16 %v313, %v312
    %v379 = vpack.c.b16 %v315, %v314
    %v380 = vpack.c.b16 %v317, %v316
    %v381 = vpack.c.b16 %v319, %v318
    %v382 = vpack.c.b16 %v321, %v320
    %v383 = vpack.c.b16 %v323, %v322
    %v384 = vpack.c.b16 %v325, %v324
    %v385 = vpack.c.b16 %v327, %v326
    %v386 = vpack.c.b16 %v329, %v328
    %v387 = vpack.c.b16 %v331, %v330
    %v388 = vpack.c.b16 %v333, %v332
    %v389 = vpack.c.b16 %v335, %v334
    %v390 = vpack.c.b16 %v337, %v336
    %v391 = vpack.c.b16 %v339, %v338
    %v392 = vpack.c.b16 %v341, %v340
    %v393 = vpack.c.b16 %v343, %v342
    %v394 = vpack.c.b16 %v345, %v344
    %vm444 = vcmask 130048
    %v446 = vsel %vm444, %v47, 0
    %448 = vmatpush.bf16.msra.mxu0 %v353
    %449 = vmatpush.bf16.msra.mxu0 %v352
    %450 = vmatpush.bf16.msra.mxu0 %v351
    %451 = vmatpush.bf16.msra.mxu0 %v350
    %452 = vmatpush.bf16.msra.mxu0 %v349
    %453 = vmatpush.bf16.msra.mxu0 %v348
    %454 = vmatpush.bf16.msra.mxu0 %v347
    %455 = vmatpush.bf16.msra.mxu0 %v346
    %456 = vmatmul.bf16.gmra.mxu0 %v41
    %v457 = vpop.f32.mrf.mxu0
    %v458 = vadd.f32 %v148, %v457
    %v459 = vpop.f32.mrf.mxu0
    %v460 = vadd.f32 %v148, %v459
    %461 = vdwg.mxu0
    %462 = vmatpush.bf16.msra.mxu0 %v361
    %463 = vmatpush.bf16.msra.mxu0 %v360
    %464 = vmatpush.bf16.msra.mxu0 %v359
    %465 = vmatpush.bf16.msra.mxu0 %v358
    %466 = vmatpush.bf16.msra.mxu0 %v357
    %467 = vmatpush.bf16.msra.mxu0 %v356
    %468 = vmatpush.bf16.msra.mxu0 %v355
    %469 = vmatpush.bf16.msra.mxu0 %v354
    %470 = vmatmul.bf16.gmra.mxu0 %v42
    %v471 = vpop.f32.mrf.mxu0
    %v472 = vadd.f32 %v458, %v471
    %v473 = vpop.f32.mrf.mxu0
    %v474 = vadd.f32 %v460, %v473
    %475 = vdwg.mxu0
    %476 = vmatpush.bf16.msra.mxu0 %v369
    %477 = vmatpush.bf16.msra.mxu0 %v368
    %478 = vmatpush.bf16.msra.mxu0 %v367
    %479 = vmatpush.bf16.msra.mxu0 %v366
    %480 = vmatpush.bf16.msra.mxu0 %v365
    %481 = vmatpush.bf16.msra.mxu0 %v364
    %482 = vmatpush.bf16.msra.mxu0 %v363
    %483 = vmatpush.bf16.msra.mxu0 %v362
    %484 = vmatmul.bf16.gmra.mxu0 %v43
    %v485 = vpop.f32.mrf.mxu0
    %v486 = vadd.f32 %v472, %v485
    %v487 = vpop.f32.mrf.mxu0
    %v488 = vadd.f32 %v474, %v487
    %489 = vdwg.mxu0
    %490 = vmatpush.bf16.msra.mxu0 %v377
    %491 = vmatpush.bf16.msra.mxu0 %v376
    %492 = vmatpush.bf16.msra.mxu0 %v375
    %493 = vmatpush.bf16.msra.mxu0 %v374
    %494 = vmatpush.bf16.msra.mxu0 %v373
    %495 = vmatpush.bf16.msra.mxu0 %v372
    %496 = vmatpush.bf16.msra.mxu0 %v371
    %497 = vmatpush.bf16.msra.mxu0 %v370
    %498 = vmatmul.bf16.gmra.mxu0 %v44
    %v499 = vpop.f32.mrf.mxu0
    %v500 = vadd.f32 %v486, %v499
    %v501 = vpop.f32.mrf.mxu0
    %v502 = vadd.f32 %v488, %v501
    %503 = vdwg.mxu0
    %504 = vmatpush.bf16.msra.mxu0 %v385
    %505 = vmatpush.bf16.msra.mxu0 %v384
    %506 = vmatpush.bf16.msra.mxu0 %v383
    %507 = vmatpush.bf16.msra.mxu0 %v382
    %508 = vmatpush.bf16.msra.mxu0 %v381
    %509 = vmatpush.bf16.msra.mxu0 %v380
    %510 = vmatpush.bf16.msra.mxu0 %v379
    %511 = vmatpush.bf16.msra.mxu0 %v378
    %512 = vmatmul.bf16.gmra.mxu0 %v45
    %v513 = vpop.f32.mrf.mxu0
    %v514 = vadd.f32 %v500, %v513
    %v515 = vpop.f32.mrf.mxu0
    %v516 = vadd.f32 %v502, %v515
    %517 = vdwg.mxu0
    %518 = vmatpush.bf16.msra.mxu0 %v393
    %519 = vmatpush.bf16.msra.mxu0 %v392
    %520 = vmatpush.bf16.msra.mxu0 %v391
    %521 = vmatpush.bf16.msra.mxu0 %v390
    %522 = vmatpush.bf16.msra.mxu0 %v389
    %523 = vmatpush.bf16.msra.mxu0 %v388
    %524 = vmatpush.bf16.msra.mxu0 %v387
    %525 = vmatpush.bf16.msra.mxu0 %v386
    %526 = vmatmul.bf16.gmra.mxu0 %v46
    %v527 = vpop.f32.mrf.mxu0
    %v528 = vadd.f32 %v514, %v527
    %v529 = vpop.f32.mrf.mxu0
    %v530 = vadd.f32 %v516, %v529
    %531 = vdwg.mxu0
    %532 = vmatpush.bf16.msra.mxu0 0
    %533 = vmatpush.bf16.msra.mxu0 0
    %534 = vmatpush.bf16.msra.mxu0 0
    %535 = vmatpush.bf16.msra.mxu0 0
    %536 = vmatpush.bf16.msra.mxu0 0
    %537 = vmatpush.bf16.msra.mxu0 0
    %538 = vmatpush.bf16.msra.mxu0 0
    %539 = vmatpush.bf16.msra.mxu0 %v394
    %540 = vmatmul.bf16.gmra.mxu0 %v446
    %v541 = vpop.f32.mrf.mxu0
    %v542 = vadd.f32 %v528, %v541
    %v543 = vpop.f32.mrf.mxu0
    %v544 = vadd.f32 %v530, %v543
    %545 = vdwg.mxu0
    %v546 = vmax.f32 %v542, 0.0
    %v547 = vmax.f32 %v544, 0.0
    %v548 = vpack.c.bf16 %v547, %v546
    %v549 = vld [vmem:[%s3] sm:$0xf]
    %v550 = vld [vmem:[%s3 + $0x4] sm:$0xf]
    %v551 = vld [vmem:[%s3 + $0x8] sm:$0xf]
    %v552 = vld [vmem:[%s3 + $0xc] sm:$0xf]
    %v553 = vld [vmem:[%s3 + $0x10] sm:$0xf]
    %v554 = vld [vmem:[%s3 + $0x14] sm:$0xf]
    %v555 = vld [vmem:[%s3 + $0x18] sm:$0xf]
    %v556 = vld [vmem:[%s3 + $0x1c] sm:$0xf]
    %v557 = vld [vmem:[%s3 + $0x20] sm:$0xf]
    %v558 = vld [vmem:[%s3 + $0x24] sm:$0xf]
    %v559 = vld [vmem:[%s3 + $0x28] sm:$0xf]
    %v560 = vld [vmem:[%s3 + $0x2c] sm:$0xf]
    %v561 = vld [vmem:[%s3 + $0x30] sm:$0xf]
    %v562 = vld [vmem:[%s3 + $0x34] sm:$0xf]
    %v563 = vld [vmem:[%s3 + $0x38] sm:$0xf]
    %v564 = vld [vmem:[%s3 + $0x3c] sm:$0xf]
    %v565 = vld [vmem:[%s4] sm:$0x1]
    %v567 = vperm.slane %v565, 0
    %v585 = vunpack.c.l.b16 %v549
    %v586 = vunpack.c.l.b16 %v550
    %v587 = vunpack.c.l.b16 %v551
    %v588 = vunpack.c.l.b16 %v552
    %v589 = vunpack.c.l.b16 %v553
    %v590 = vunpack.c.l.b16 %v554
    %v591 = vunpack.c.l.b16 %v555
    %v592 = vunpack.c.l.b16 %v556
    %v593 = vunpack.c.l.b16 %v557
    %v594 = vunpack.c.l.b16 %v558
    %v595 = vunpack.c.l.b16 %v559
    %v596 = vunpack.c.l.b16 %v560
    %v597 = vunpack.c.l.b16 %v561
    %v598 = vunpack.c.l.b16 %v562
    %v599 = vunpack.c.l.b16 %v563
    %v600 = vunpack.c.l.b16 %v564
    %v601 = vpack.c.b16 %v586, %v585
    %v602 = vpack.c.b16 %v588, %v587
    %v603 = vpack.c.b16 %v590, %v589
    %v604 = vpack.c.b16 %v592, %v591
    %v605 = vpack.c.b16 %v594, %v593
    %v606 = vpack.c.b16 %v596, %v595
    %v607 = vpack.c.b16 %v598, %v597
    %v608 = vpack.c.b16 %v600, %v599
    %617 = vmatpush.bf16.msra.mxu0 %v608
    %618 = vmatpush.bf16.msra.mxu0 %v607
    %619 = vmatpush.bf16.msra.mxu0 %v606
    %620 = vmatpush.bf16.msra.mxu0 %v605
    %621 = vmatpush.bf16.msra.mxu0 %v604
    %622 = vmatpush.bf16.msra.mxu0 %v603
    %623 = vmatpush.bf16.msra.mxu0 %v602
    %624 = vmatpush.bf16.msra.mxu0 %v601
    %625 = vmatmul.bf16.gmra.mxu0 %v548
    %v626 = vpop.f32.mrf.mxu0
    %v627 = vadd.f32 %v567, %v626
    %v628 = vpop.f32.mrf.mxu0
    %v629 = vadd.f32 %v567, %v628
    %630 = vdwg.mxu0
    %v631 = vmax.f32 %v627, 0.0
    %v632 = vmax.f32 %v629, 0.0
    %v633 = vpack.c.bf16 %v632, %v631
    %v634 = vld [vmem:[%s5] sm:$0xff]
    %v635 = vld [vmem:[%s5 + $0x8] sm:$0xff]
    %v636 = vld [vmem:[%s5 + $0x10] sm:$0xff]
    %v637 = vld [vmem:[%s5 + $0x18] sm:$0xf]
    %v638 = vld [vmem:[%s5 + $0x1c] sm:$0xff]
    %v639 = vld [vmem:[%s5 + $0x24] sm:$0xff]
    %v640 = vld [vmem:[%s5 + $0x2c] sm:$0xff]
    %v641 = vld [vmem:[%s5 + $0x34] sm:$0xf]
    %v642 = vld [vmem:[%s5 + $0x38] sm:$0xff]
    %v643 = vld [vmem:[%s5 + $0x40] sm:$0xff]
    %v644 = vld [vmem:[%s5 + $0x48] sm:$0xff]
    %v645 = vld [vmem:[%s5 + $0x50] sm:$0xf]
    %v646 = vld [vmem:[%s5 + $0x54] sm:$0xff]
    %v647 = vld [vmem:[%s5 + $0x5c] sm:$0xff]
    %v648 = vld [vmem:[%s5 + $0x64] sm:$0xff]
    %v649 = vld [vmem:[%s5 + $0x6c] sm:$0xf]
    %v650 = vld [vmem:[%s5 + $0x70] sm:$0xff]
    %v651 = vld [vmem:[%s5 + $0x78] sm:$0xff]
    %v652 = vld [vmem:[%s5 + $0x80] sm:$0xff]
    %v653 = vld [vmem:[%s5 + $0x88] sm:$0xf]
    %v654 = vld [vmem:[%s5 + $0x8c] sm:$0xff]
    %v655 = vld [vmem:[%s5 + $0x94] sm:$0xff]
    %v656 = vld [vmem:[%s5 + $0x9c] sm:$0xff]
    %v657 = vld [vmem:[%s5 + $0xa4] sm:$0xf]
    %v658 = vld [vmem:[%s5 + $0xa8] sm:$0xff]
    %v659 = vld [vmem:[%s5 + $0xb0] sm:$0xff]
    %v660 = vld [vmem:[%s5 + $0xb8] sm:$0xff]
    %v661 = vld [vmem:[%s5 + $0xc0] sm:$0xf]
    %v662 = vld [vmem:[%s5 + $0xc4] sm:$0xff]
    %v663 = vld [vmem:[%s5 + $0xcc] sm:$0xff]
    %v664 = vld [vmem:[%s5 + $0xd4] sm:$0xff]
    %v665 = vld [vmem:[%s5 + $0xdc] sm:$0xf]
    %v666 = vld [vmem:[%s5 + $0xe0] sm:$0xff]
    %v667 = vld [vmem:[%s5 + $0xe8] sm:$0xff]
    %v668 = vld [vmem:[%s5 + $0xf0] sm:$0xff]
    %v669 = vld [vmem:[%s5 + $0xf8] sm:$0xf]
    %v670 = vld [vmem:[%s5 + $0xfc] sm:$0xff]
    %v671 = vld [vmem:[%s5 + $0x104] sm:$0xff]
    %v672 = vld [vmem:[%s5 + $0x10c] sm:$0xff]
    %v673 = vld [vmem:[%s5 + $0x114] sm:$0xf]
    %v674 = vld [vmem:[%s5 + $0x118] sm:$0xff]
    %v675 = vld [vmem:[%s5 + $0x120] sm:$0xff]
    %v676 = vld [vmem:[%s5 + $0x128] sm:$0xff]
    %v677 = vld [vmem:[%s5 + $0x130] sm:$0xf]
    %v678 = vld [vmem:[%s5 + $0x134] sm:$0xff]
    %v679 = vld [vmem:[%s5 + $0x13c] sm:$0xff]
    %v680 = vld [vmem:[%s5 + $0x144] sm:$0xff]
    %v681 = vld [vmem:[%s5 + $0x14c] sm:$0xf]
    %v682 = vld [vmem:[%s5 + $0x150] sm:$0xff]
    %v683 = vld [vmem:[%s5 + $0x158] sm:$0xff]
    %v684 = vld [vmem:[%s5 + $0x160] sm:$0xff]
    %v685 = vld [vmem:[%s5 + $0x168] sm:$0xf]
    %v686 = vld [vmem:[%s5 + $0x16c] sm:$0xff]
    %v687 = vld [vmem:[%s5 + $0x174] sm:$0xff]
    %v688 = vld [vmem:[%s5 + $0x17c] sm:$0xff]
    %v689 = vld [vmem:[%s5 + $0x184] sm:$0xf]
    %v690 = vld [vmem:[%s5 + $0x188] sm:$0xff]
    %v691 = vld [vmem:[%s5 + $0x190] sm:$0xff]
    %v692 = vld [vmem:[%s5 + $0x198] sm:$0xff]
    %v693 = vld [vmem:[%s5 + $0x1a0] sm:$0xf]
    %v694 = vld [vmem:[%s5 + $0x1a4] sm:$0xff]
    %v695 = vld [vmem:[%s5 + $0x1ac] sm:$0xff]
    %v696 = vld [vmem:[%s5 + $0x1b4] sm:$0xff]
    %v697 = vld [vmem:[%s5 + $0x1bc] sm:$0xf]
    %v698 = vld [vmem:[%s6] sm:$0x7f]
    %v700 = vperm.slane %v698, 0
    %v701 = vperm.slane %v698, 1
    %v702 = vperm.slane %v698, 2
    %v703 = vperm.slane %v698, 3
    %v704 = vperm.slane %v698, 4
    %v705 = vperm.slane %v698, 5
    %v706 = vperm.slane %v698, 6
    %v778 = vunpack.c.l.b16 %v634
    %v779 = vunpack.c.h.b16 %v634
    %v780 = vunpack.c.l.b16 %v635
    %v781 = vunpack.c.h.b16 %v635
    %v782 = vunpack.c.l.b16 %v636
    %v783 = vunpack.c.h.b16 %v636
    %v784 = vunpack.c.l.b16 %v637
    %v785 = vunpack.c.l.b16 %v638
    %v786 = vunpack.c.h.b16 %v638
    %v787 = vunpack.c.l.b16 %v639
    %v788 = vunpack.c.h.b16 %v639
    %v789 = vunpack.c.l.b16 %v640
    %v790 = vunpack.c.h.b16 %v640
    %v791 = vunpack.c.l.b16 %v641
    %v792 = vunpack.c.l.b16 %v642
    %v793 = vunpack.c.h.b16 %v642
    %v794 = vunpack.c.l.b16 %v643
    %v795 = vunpack.c.h.b16 %v643
    %v796 = vunpack.c.l.b16 %v644
    %v797 = vunpack.c.h.b16 %v644
    %v798 = vunpack.c.l.b16 %v645
    %v799 = vunpack.c.l.b16 %v646
    %v800 = vunpack.c.h.b16 %v646
    %v801 = vunpack.c.l.b16 %v647
    %v802 = vunpack.c.h.b16 %v647
    %v803 = vunpack.c.l.b16 %v648
    %v804 = vunpack.c.h.b16 %v648
    %v805 = vunpack.c.l.b16 %v649
    %v806 = vunpack.c.l.b16 %v650
    %v807 = vunpack.c.h.b16 %v650
    %v808 = vunpack.c.l.b16 %v651
    %v809 = vunpack.c.h.b16 %v651
    %v810 = vunpack.c.l.b16 %v652
    %v811 = vunpack.c.h.b16 %v652
    %v812 = vunpack.c.l.b16 %v653
    %v813 = vunpack.c.l.b16 %v654
    %v814 = vunpack.c.h.b16 %v654
    %v815 = vunpack.c.l.b16 %v655
    %v816 = vunpack.c.h.b16 %v655
    %v817 = vunpack.c.l.b16 %v656
    %v818 = vunpack.c.h.b16 %v656
    %v819 = vunpack.c.l.b16 %v657
    %v820 = vunpack.c.l.b16 %v658
    %v821 = vunpack.c.h.b16 %v658
    %v822 = vunpack.c.l.b16 %v659
    %v823 = vunpack.c.h.b16 %v659
    %v824 = vunpack.c.l.b16 %v660
    %v825 = vunpack.c.h.b16 %v660
    %v826 = vunpack.c.l.b16 %v661
    %v827 = vunpack.c.l.b16 %v662
    %v828 = vunpack.c.h.b16 %v662
    %v829 = vunpack.c.l.b16 %v663
    %v830 = vunpack.c.h.b16 %v663
    %v831 = vunpack.c.l.b16 %v664
    %v832 = vunpack.c.h.b16 %v664
    %v833 = vunpack.c.l.b16 %v665
    %v834 = vunpack.c.l.b16 %v666
    %v835 = vunpack.c.h.b16 %v666
    %v836 = vunpack.c.l.b16 %v667
    %v837 = vunpack.c.h.b16 %v667
    %v838 = vunpack.c.l.b16 %v668
    %v839 = vunpack.c.h.b16 %v668
    %v840 = vunpack.c.l.b16 %v669
    %v841 = vunpack.c.l.b16 %v670
    %v842 = vunpack.c.h.b16 %v670
    %v843 = vunpack.c.l.b16 %v671
    %v844 = vunpack.c.h.b16 %v671
    %v845 = vunpack.c.l.b16 %v672
    %v846 = vunpack.c.h.b16 %v672
    %v847 = vunpack.c.l.b16 %v673
    %v848 = vunpack.c.l.b16 %v674
    %v849 = vunpack.c.h.b16 %v674
    %v850 = vunpack.c.l.b16 %v675
    %v851 = vunpack.c.h.b16 %v675
    %v852 = vunpack.c.l.b16 %v676
    %v853 = vunpack.c.h.b16 %v676
    %v854 = vunpack.c.l.b16 %v677
    %v855 = vunpack.c.l.b16 %v678
    %v856 = vunpack.c.h.b16 %v678
    %v857 = vunpack.c.l.b16 %v679
    %v858 = vunpack.c.h.b16 %v679
    %v859 = vunpack.c.l.b16 %v680
    %v860 = vunpack.c.h.b16 %v680
    %v861 = vunpack.c.l.b16 %v681
    %v862 = vunpack.c.l.b16 %v682
    %v863 = vunpack.c.h.b16 %v682
    %v864 = vunpack.c.l.b16 %v683
    %v865 = vunpack.c.h.b16 %v683
    %v866 = vunpack.c.l.b16 %v684
    %v867 = vunpack.c.h.b16 %v684
    %v868 = vunpack.c.l.b16 %v685
    %v869 = vunpack.c.l.b16 %v686
    %v870 = vunpack.c.h.b16 %v686
    %v871 = vunpack.c.l.b16 %v687
    %v872 = vunpack.c.h.b16 %v687
    %v873 = vunpack.c.l.b16 %v688
    %v874 = vunpack.c.h.b16 %v688
    %v875 = vunpack.c.l.b16 %v689
    %v876 = vunpack.c.l.b16 %v690
    %v877 = vunpack.c.h.b16 %v690
    %v878 = vunpack.c.l.b16 %v691
    %v879 = vunpack.c.h.b16 %v691
    %v880 = vunpack.c.l.b16 %v692
    %v881 = vunpack.c.h.b16 %v692
    %v882 = vunpack.c.l.b16 %v693
    %v883 = vunpack.c.l.b16 %v694
    %v884 = vunpack.c.h.b16 %v694
    %v885 = vunpack.c.l.b16 %v695
    %v886 = vunpack.c.h.b16 %v695
    %v887 = vunpack.c.l.b16 %v696
    %v888 = vunpack.c.h.b16 %v696
    %v889 = vunpack.c.l.b16 %v697
    %v890 = vpack.c.b16 %v785, %v778
    %v891 = vpack.c.b16 %v786, %v779
    %v892 = vpack.c.b16 %v787, %v780
    %v893 = vpack.c.b16 %v788, %v781
    %v894 = vpack.c.b16 %v789, %v782
    %v895 = vpack.c.b16 %v790, %v783
    %v896 = vpack.c.b16 %v791, %v784
    %v897 = vpack.c.b16 %v799, %v792
    %v898 = vpack.c.b16 %v800, %v793
    %v899 = vpack.c.b16 %v801, %v794
    %v900 = vpack.c.b16 %v802, %v795
    %v901 = vpack.c.b16 %v803, %v796
    %v902 = vpack.c.b16 %v804, %v797
    %v903 = vpack.c.b16 %v805, %v798
    %v904 = vpack.c.b16 %v813, %v806
    %v905 = vpack.c.b16 %v814, %v807
    %v906 = vpack.c.b16 %v815, %v808
    %v907 = vpack.c.b16 %v816, %v809
    %v908 = vpack.c.b16 %v817, %v810
    %v909 = vpack.c.b16 %v818, %v811
    %v910 = vpack.c.b16 %v819, %v812
    %v911 = vpack.c.b16 %v827, %v820
    %v912 = vpack.c.b16 %v828, %v821
    %v913 = vpack.c.b16 %v829, %v822
    %v914 = vpack.c.b16 %v830, %v823
    %v915 = vpack.c.b16 %v831, %v824
    %v916 = vpack.c.b16 %v832, %v825
    %v917 = vpack.c.b16 %v833, %v826
    %v918 = vpack.c.b16 %v841, %v834
    %v919 = vpack.c.b16 %v842, %v835
    %v920 = vpack.c.b16 %v843, %v836
    %v921 = vpack.c.b16 %v844, %v837
    %v922 = vpack.c.b16 %v845, %v838
    %v923 = vpack.c.b16 %v846, %v839
    %v924 = vpack.c.b16 %v847, %v840
    %v925 = vpack.c.b16 %v855, %v848
    %v926 = vpack.c.b16 %v856, %v849
    %v927 = vpack.c.b16 %v857, %v850
    %v928 = vpack.c.b16 %v858, %v851
    %v929 = vpack.c.b16 %v859, %v852
    %v930 = vpack.c.b16 %v860, %v853
    %v931 = vpack.c.b16 %v861, %v854
    %v932 = vpack.c.b16 %v869, %v862
    %v933 = vpack.c.b16 %v870, %v863
    %v934 = vpack.c.b16 %v871, %v864
    %v935 = vpack.c.b16 %v872, %v865
    %v936 = vpack.c.b16 %v873, %v866
    %v937 = vpack.c.b16 %v874, %v867
    %v938 = vpack.c.b16 %v875, %v868
    %v939 = vpack.c.b16 %v883, %v876
    %v940 = vpack.c.b16 %v884, %v877
    %v941 = vpack.c.b16 %v885, %v878
    %v942 = vpack.c.b16 %v886, %v879
    %v943 = vpack.c.b16 %v887, %v880
    %v944 = vpack.c.b16 %v888, %v881
    %v945 = vpack.c.b16 %v889, %v882
    %1002 = vmatpush.bf16.msra.mxu0 %v939
    %1003 = vmatpush.bf16.msra.mxu0 %v932
    %1004 = vmatpush.bf16.msra.mxu0 %v925
    %1005 = vmatpush.bf16.msra.mxu0 %v918
    %1006 = vmatpush.bf16.msra.mxu0 %v911
    %1007 = vmatpush.bf16.msra.mxu0 %v904
    %1008 = vmatpush.bf16.msra.mxu0 %v897
    %1009 = vmatpush.bf16.msra.mxu0 %v890
    %1010 = vmatmul.bf16.gmra.mxu0 %v633
    %v1011 = vpop.f32.mrf.mxu0
    %v1012 = vadd.f32 %v700, %v1011
    %v1013 = vpop.f32.mrf.mxu0
    %v1014 = vadd.f32 %v700, %v1013
    %1015 = vdwg.mxu0
    %1016 = vmatpush.bf16.msra.mxu0 %v940
    %1017 = vmatpush.bf16.msra.mxu0 %v933
    %1018 = vmatpush.bf16.msra.mxu0 %v926
    %1019 = vmatpush.bf16.msra.mxu0 %v919
    %1020 = vmatpush.bf16.msra.mxu0 %v912
    %1021 = vmatpush.bf16.msra.mxu0 %v905
    %1022 = vmatpush.bf16.msra.mxu0 %v898
    %1023 = vmatpush.bf16.msra.mxu0 %v891
    %1024 = vmatmul.bf16.gmra.mxu0 %v633
    %v1025 = vpop.f32.mrf.mxu0
    %v1026 = vadd.f32 %v701, %v1025
    %v1027 = vpop.f32.mrf.mxu0
    %v1028 = vadd.f32 %v701, %v1027
    %1029 = vdwg.mxu0
    %1030 = vmatpush.bf16.msra.mxu0 %v941
    %1031 = vmatpush.bf16.msra.mxu0 %v934
    %1032 = vmatpush.bf16.msra.mxu0 %v927
    %1033 = vmatpush.bf16.msra.mxu0 %v920
    %1034 = vmatpush.bf16.msra.mxu0 %v913
    %1035 = vmatpush.bf16.msra.mxu0 %v906
    %1036 = vmatpush.bf16.msra.mxu0 %v899
    %1037 = vmatpush.bf16.msra.mxu0 %v892
    %1038 = vmatmul.bf16.gmra.mxu0 %v633
    %v1039 = vpop.f32.mrf.mxu0
    %v1040 = vadd.f32 %v702, %v1039
    %v1041 = vpop.f32.mrf.mxu0
    %v1042 = vadd.f32 %v702, %v1041
    %1043 = vdwg.mxu0
    %1044 = vmatpush.bf16.msra.mxu0 %v942
    %1045 = vmatpush.bf16.msra.mxu0 %v935
    %1046 = vmatpush.bf16.msra.mxu0 %v928
    %1047 = vmatpush.bf16.msra.mxu0 %v921
    %1048 = vmatpush.bf16.msra.mxu0 %v914
    %1049 = vmatpush.bf16.msra.mxu0 %v907
    %1050 = vmatpush.bf16.msra.mxu0 %v900
    %1051 = vmatpush.bf16.msra.mxu0 %v893
    %1052 = vmatmul.bf16.gmra.mxu0 %v633
    %v1053 = vpop.f32.mrf.mxu0
    %v1054 = vadd.f32 %v703, %v1053
    %v1055 = vpop.f32.mrf.mxu0
    %v1056 = vadd.f32 %v703, %v1055
    %1057 = vdwg.mxu0
    %1058 = vmatpush.bf16.msra.mxu0 %v943
    %1059 = vmatpush.bf16.msra.mxu0 %v936
    %1060 = vmatpush.bf16.msra.mxu0 %v929
    %1061 = vmatpush.bf16.msra.mxu0 %v922
    %1062 = vmatpush.bf16.msra.mxu0 %v915
    %1063 = vmatpush.bf16.msra.mxu0 %v908
    %1064 = vmatpush.bf16.msra.mxu0 %v901
    %1065 = vmatpush.bf16.msra.mxu0 %v894
    %1066 = vmatmul.bf16.gmra.mxu0 %v633
    %v1067 = vpop.f32.mrf.mxu0
    %v1068 = vadd.f32 %v704, %v1067
    %v1069 = vpop.f32.mrf.mxu0
    %v1070 = vadd.f32 %v704, %v1069
    %1071 = vdwg.mxu0
    %1072 = vmatpush.bf16.msra.mxu0 %v944
    %1073 = vmatpush.bf16.msra.mxu0 %v937
    %1074 = vmatpush.bf16.msra.mxu0 %v930
    %1075 = vmatpush.bf16.msra.mxu0 %v923
    %1076 = vmatpush.bf16.msra.mxu0 %v916
    %1077 = vmatpush.bf16.msra.mxu0 %v909
    %1078 = vmatpush.bf16.msra.mxu0 %v902
    %1079 = vmatpush.bf16.msra.mxu0 %v895
    %1080 = vmatmul.bf16.gmra.mxu0 %v633
    %v1081 = vpop.f32.mrf.mxu0
    %v1082 = vadd.f32 %v705, %v1081
    %v1083 = vpop.f32.mrf.mxu0
    %v1084 = vadd.f32 %v705, %v1083
    %1085 = vdwg.mxu0
    %1086 = vmatpush.bf16.msra.mxu0 %v945
    %1087 = vmatpush.bf16.msra.mxu0 %v938
    %1088 = vmatpush.bf16.msra.mxu0 %v931
    %1089 = vmatpush.bf16.msra.mxu0 %v924
    %1090 = vmatpush.bf16.msra.mxu0 %v917
    %1091 = vmatpush.bf16.msra.mxu0 %v910
    %1092 = vmatpush.bf16.msra.mxu0 %v903
    %1093 = vmatpush.bf16.msra.mxu0 %v896
    %1094 = vmatmul.bf16.gmra.mxu0 %v633
    %v1095 = vpop.f32.mrf.mxu0
    %v1096 = vadd.f32 %v706, %v1095
    %v1097 = vpop.f32.mrf.mxu0
    %v1098 = vadd.f32 %v706, %v1097
    %1099 = vdwg.mxu0
    %v1100 = vmul.f32 %v1012, 0.5
    %v1101 = vmul.f32 %v1026, 0.5
    %v1102 = vmul.f32 %v1040, 0.5
    %v1103 = vmul.f32 %v1054, 0.5
    %v1104 = vmul.f32 %v1068, 0.5
    %v1105 = vmul.f32 %v1082, 0.5
    %v1106 = vmul.f32 %v1096, 0.5
    %v1107 = vmul.f32 %v1014, 0.5
    %v1108 = vmul.f32 %v1028, 0.5
    %v1109 = vmul.f32 %v1042, 0.5
    %v1110 = vmul.f32 %v1056, 0.5
    %v1111 = vmul.f32 %v1070, 0.5
    %v1112 = vmul.f32 %v1084, 0.5
    %v1113 = vmul.f32 %v1098, 0.5
    %v1114 = vtanh.pop %v1100
    %v1115 = vtanh.pop %v1101
    %v1116 = vtanh.pop %v1102
    %v1117 = vtanh.pop %v1103
    %v1118 = vtanh.pop %v1104
    %v1119 = vtanh.pop %v1105
    %v1120 = vtanh.pop %v1106
    %v1121 = vtanh.pop %v1107
    %v1122 = vtanh.pop %v1108
    %v1123 = vtanh.pop %v1109
    %v1124 = vtanh.pop %v1110
    %v1125 = vtanh.pop %v1111
    %v1126 = vtanh.pop %v1112
    %v1127 = vtanh.pop %v1113
    %v1128 = vmul.f32 %v1114, 0.5
    %v1129 = vmul.f32 %v1115, 0.5
    %v1130 = vmul.f32 %v1116, 0.5
    %v1131 = vmul.f32 %v1117, 0.5
    %v1132 = vmul.f32 %v1118, 0.5
    %v1133 = vmul.f32 %v1119, 0.5
    %v1134 = vmul.f32 %v1120, 0.5
    %v1135 = vmul.f32 %v1121, 0.5
    %v1136 = vmul.f32 %v1122, 0.5
    %v1137 = vmul.f32 %v1123, 0.5
    %v1138 = vmul.f32 %v1124, 0.5
    %v1139 = vmul.f32 %v1125, 0.5
    %v1140 = vmul.f32 %v1126, 0.5
    %v1141 = vmul.f32 %v1127, 0.5
    %v1142 = vadd.f32 %v1128, 0.5
    %v1143 = vadd.f32 %v1129, 0.5
    %v1144 = vadd.f32 %v1130, 0.5
    %v1145 = vadd.f32 %v1131, 0.5
    %v1146 = vadd.f32 %v1132, 0.5
    %v1147 = vadd.f32 %v1133, 0.5
    %v1148 = vadd.f32 %v1134, 0.5
    %v1149 = vadd.f32 %v1135, 0.5
    %v1150 = vadd.f32 %v1136, 0.5
    %v1151 = vadd.f32 %v1137, 0.5
    %v1152 = vadd.f32 %v1138, 0.5
    %v1153 = vadd.f32 %v1139, 0.5
    %v1154 = vadd.f32 %v1140, 0.5
    %v1155 = vadd.f32 %v1141, 0.5
    %1156 = vst [vmem:[#allocation2] sm:$0xff] %v1142
    %1157 = vst [vmem:[#allocation2 + $0x8] sm:$0xff] %v1143
    %1158 = vst [vmem:[#allocation2 + $0x10] sm:$0xff] %v1144
    %1159 = vst [vmem:[#allocation2 + $0x18] sm:$0xff] %v1145
    %1160 = vst [vmem:[#allocation2 + $0x20] sm:$0xff] %v1146
    %1161 = vst [vmem:[#allocation2 + $0x28] sm:$0xff] %v1147
    %1162 = vst.msk [vmem:[#allocation2 + $0x30] sm:$0xff] %vm444, %v1148
    %1163 = vst [vmem:[#allocation2 + $0x38] sm:$0xff] %v1149
    %1164 = vst [vmem:[#allocation2 + $0x40] sm:$0xff] %v1150
    %1165 = vst [vmem:[#allocation2 + $0x48] sm:$0xff] %v1151
    %1166 = vst [vmem:[#allocation2 + $0x50] sm:$0xff] %v1152
    %1167 = vst [vmem:[#allocation2 + $0x58] sm:$0xff] %v1153
    %1168 = vst [vmem:[#allocation2 + $0x60] sm:$0xff] %v1154
    %1169 = vst.msk [vmem:[#allocation2 + $0x68] sm:$0xff] %vm444, %v1155
    // Predicated region
    $region30: #{autoencoder_forward.1} parent=1 // pred_check
      _
    $region31: #{autoencoder_forward.1} parent=1 // pred_check_branch
      %1171 = sbr.rel (0) target = $region33
    $region32: #{autoencoder_forward.1} parent=1 // pred_region
      // Predicated region
      $region34: #{autoencoder_forward.1} parent=32 // pred_check
        _
      $region35: #{autoencoder_forward.1} parent=32 // pred_check_branch
        %1173 = sbr.rel (0) target = $region37
      $region36: #{autoencoder_forward.1} parent=32 // pred_region
        // Predicated region
        $region38: #{autoencoder_forward.1} parent=36 // pred_check
          _
        $region39: #{autoencoder_forward.1} parent=36 // pred_check_branch
          %1175 = sbr.rel (0) target = $region41
        $region40: #{autoencoder_forward.1} parent=36 // pred_region
          loop: start=0, step=1, limit=1
          $region42: #{autoencoder_forward.1} parent=40 // loop_pre_header
            _
          $region43: #{autoencoder_forward.1} parent=40 // loop_header
            %s1177 = sphi 0, %s1181
            %p1178 = scmp.ge.s32.totalorder %s1177, 1
            %s1182 = sphi [#allocation2], [#allocation2]
            %s1183 = sphi %s7, %s7
          $region44: #{autoencoder_forward.1} parent=40 // loop_header_branch
            %1180 = sbr.rel (%p1178) target = $region48
          $region45: #{autoencoder_forward.1} parent=40 // loop_body
            %v1184 = vld [vmem:[%s1182] sm:$0xff]
            %1185 = vst [vmem:[%s1183] sm:$0xff] %v1184
            %v1186 = vld [vmem:[%s1182 + $0x8] sm:$0xff]
            %1187 = vst [vmem:[%s1183 + $0x8] sm:$0xff] %v1186
            %v1188 = vld [vmem:[%s1182 + $0x10] sm:$0xff]
            %1189 = vst [vmem:[%s1183 + $0x10] sm:$0xff] %v1188
            %v1190 = vld [vmem:[%s1182 + $0x18] sm:$0xff]
            %1191 = vst [vmem:[%s1183 + $0x18] sm:$0xff] %v1190
            %v1192 = vld [vmem:[%s1182 + $0x20] sm:$0xff]
            %1193 = vst [vmem:[%s1183 + $0x20] sm:$0xff] %v1192
            %v1194 = vld [vmem:[%s1182 + $0x28] sm:$0xff]
            %1195 = vst [vmem:[%s1183 + $0x28] sm:$0xff] %v1194
            %v1196 = vld [vmem:[%s1182 + $0x30] sm:$0xff]
            %1197 = vst [vmem:[%s1183 + $0x30] sm:$0xff] %v1196
          $region46: #{autoencoder_forward.1} parent=40 // loop_footer
            %s1181 = sadd.s32 1, %s1177
          $region47: #{autoencoder_forward.1} parent=40 // loop_footer_branch
            %1176 = sbr.rel target = $region43
          $region48: #{autoencoder_forward.1} parent=40 // loop_exit
            _
        $region41: #{autoencoder_forward.1} parent=36 // pred_fallthru
          _
        // Predicated region
        $region49: #{autoencoder_forward.1} parent=36 // pred_check
          _
        $region50: #{autoencoder_forward.1} parent=36 // pred_check_branch
          %1199 = sbr.rel target = $region52
        $region51: #{autoencoder_forward.1} parent=36 // pred_region
          _
        $region52: #{autoencoder_forward.1} parent=36 // pred_fallthru
          _
      $region37: #{autoencoder_forward.1} parent=32 // pred_fallthru
        _
      %1200 = vnop
    $region33: #{autoencoder_forward.1} parent=1 // pred_fallthru
      _
    // Predicated region
    $region53: #{autoencoder_forward.1} parent=1 // pred_check
      _
    $region54: #{autoencoder_forward.1} parent=1 // pred_check_branch
      %1202 = sbr.rel (0) target = $region56
    $region55: #{autoencoder_forward.1} parent=1 // pred_region
      _
    $region56: #{autoencoder_forward.1} parent=1 // pred_fallthru
      _

</llo_original>
